<compile_context>
chip_gen: v7x
topology: tpu7x:2x2x1
jax: 0.10.0
libtpu: 0.0.40
codegen_flags: <defaults>
</compile_context>

<pallas_src>
import functools
import math

import jax
import jax.numpy as jnp
from jax.experimental import pallas as pl
from jax.experimental.pallas import tpu as pltpu


# ------------------------------ Pallas kernels ------------------------------ #

def _conv1x1_tanh_kernel(x_ref, w0_ref, b0_ref, o_ref):
    """num_layer == 1 path: Conv1d(k=1) + tanh on a (tile_m, Cin) row block."""
    y = jnp.dot(x_ref[...].astype(w0_ref.dtype), w0_ref[...],
                preferred_element_type=jnp.float32) + b0_ref[...]
    o_ref[...] = jnp.tanh(y).astype(o_ref.dtype)


def _fused_cnn_kernel(x_ref, w0_ref, b0_ref, w3_ref, b3_ref, o_ref, *,
                      seq_len, act_dtype):
    """Whole CNN stack for one block of tile_m // seq_len whole sequences.

    x_ref : (tile_m, Cin)     flattened (batch*seq, channels) rows
    w0_ref: (Cin, Hp)         k=1 tap, Hp = hidden padded to a multiple of 128
    b0_ref: (1, Hp)           f32 (zero in padded columns)
    w3_ref: (L-1, Hp, 3*Hp)   per k=3 layer: [Wl | Wc | Wr] taps (zero-padded)
    b3_ref: (L-1, 1, Hp)      f32
    o_ref : (tile_m, Hp)      lane-dense output slab
    """
    cdt = w0_ref.dtype                       # matmul-input dtype (bf16 by default)
    tile_m = x_ref.shape[0]
    hp = w0_ref.shape[1]
    num_conv3 = w3_ref.shape[0]

    # ---- layer 0: k=1 conv == (M, Cin) @ (Cin, Hp); bias-add in f32 ---------
    y0 = jnp.dot(x_ref[...].astype(cdt), w0_ref[...],
                 preferred_element_type=jnp.float32) + b0_ref[...]
    act = jnp.tanh(y0.astype(act_dtype))     # bf16 tanh on v6e/v7x, f32 on v5e

    # Boundary masks, hoisted out of the (unrolled) layer loop and kept as a
    # (tile_m, 1) column (JAX does not CSE broadcasts; a full (tile_m, Hp) int
    # index kept live across layers would inflate vreg pressure).
    # NOTE: partial last-tile correctness relies on every tile starting at a
    # sequence boundary (tile_m % seq_len == 0, enforced by _pick_row_tile):
    # any rolled-in padding/garbage row is always masked by not_first/not_last.
    pos = jax.lax.broadcasted_iota(jnp.int32, (tile_m, 1), 0)
    pos_in_seq = pos % seq_len
    not_first = pos_in_seq != 0
    not_last = pos_in_seq != (seq_len - 1)

    # ---- k=3 layers: one wide MXU matmul + XLU rolls per layer --------------
    # num_conv3 is a small static count -> unrolled loop, static weight slices.
    # With hp a multiple of 128, the three tap slices are lane-tile aligned.
    for layer in range(num_conv3):
        y3 = jnp.dot(act.astype(cdt), w3_ref[layer],
                     preferred_element_type=jnp.float32)        # (tile_m, 3*hp) f32
        z_l = y3[:, :hp]                  # tap applied to x[t-1]
        z_c = y3[:, hp:2 * hp]            # tap applied to x[t]
        z_r = y3[:, 2 * hp:]              # tap applied to x[t+1]
        # out[t] needs z_l[t-1] and z_r[t+1]; circular sublane rolls + masks
        # reproduce Conv1d padding=1 at sequence boundaries.
        left = jnp.where(not_first, pltpu.roll(z_l, 1, axis=0), 0.0)
        right = jnp.where(not_last, pltpu.roll(z_r, tile_m - 1, axis=0), 0.0)
        act = jnp.tanh((left + z_c + right + b3_ref[layer]).astype(act_dtype))

    o_ref[...] = act.astype(o_ref.dtype)    # unmasked, lane-dense store


# ------------------------------ JAX wrappers --------------------------------- #

def _round_up(n, m):
    return ((n + m - 1) // m) * m


def _pad_last(a, target):
    pad = target - a.shape[-1]
    if pad == 0:
        return a
    return jnp.pad(a, [(0, 0)] * (a.ndim - 1) + [(0, pad)])


def _pick_row_tile(batch, seq_len, target_rows):
    """Rows per grid step.  Invariants:
      * tiles hold WHOLE sequences (tile_m % seq_len == 0) so the k=3 rolls
        never need a cross-tile halo and boundary masks stay valid even for a
        partial last tile,
      * tile_m is a multiple of 8 (sublane) unless it must be the full extent,
      * when batch >= 2 the grid keeps >= 2 steps so the 'parallel' axis can be
        sharded across both TensorCores on v7x (and DMA/compute overlap).
    """
    M = batch * seq_len
    cap = batch if batch < 2 else -(-batch // 2)          # ceil(batch / 2)
    per = max(1, min(cap, max(1, target_rows // seq_len)))
    for p in range(per, 0, -1):                           # prefer keeping >=2 steps
        if (p * seq_len) % 8 == 0:
            return p * seq_len
    for p in range(per + 1, batch):                       # else grow toward alignment
        if (p * seq_len) % 8 == 0:
            return p * seq_len
    return M                                              # full extent is always legal


def _bf16_epilogue_ok():
    """bf16 tanh/bias epilogue only where the VPU/EUP have a bf16 datapath."""
    try:
        kind = jax.devices()[0].device_kind.lower()
    except Exception:
        return False
    return ("v6" in kind) or ("v7" in kind)


def _pack_padded_weights(params, hp):
    """Zero-pad hidden dim to hp lanes; lay each k=3 layer as one [Wl|Wc|Wr] slab."""
    H = params["w0"].shape[1]
    w0p = _pad_last(params["w0"], hp)                      # (Cin, hp)
    b0p = _pad_last(params["b0"], hp)                      # (1, hp) f32
    w3p = b3p = None
    if params.get("w3") is not None:
        w3 = params["w3"]                                  # (L-1, 3, H, H)
        L1 = w3.shape[0]
        wpad = jnp.zeros((L1, 3, hp, hp), w3.dtype).at[:, :, :H, :H].set(w3)
        w3p = jnp.concatenate([wpad[:, 0], wpad[:, 1], wpad[:, 2]], axis=-1)  # (L-1, hp, 3hp)
        b3p = _pad_last(params["b3"], hp)                  # (L-1, 1, hp) f32
    return w0p, b0p, w3p, b3p


def cnn_model_forward(params, x, *, target_rows=4096, out_dtype=None):
    """x: (B, S, input_dim) -> (B, S, hidden_dim). Mirrors CNN_Model.forward (eval).

    out_dtype: set to jnp.bfloat16 to halve HBM writeback if downstream accepts it.
    """
    B, S, Cin = x.shape
    H = params["w0"].shape[1]
    Hp = _round_up(max(H, 128), 128)        # lane-dense hidden width
    out_dtype = x.dtype if out_dtype is None else out_dtype
    M = B * S
    x2d = x.reshape(M, Cin)                 # fuse batch & seq into the MXU M axis
    tile_m = _pick_row_tile(B, S, target_rows)
    grid = (pl.cdiv(M, tile_m),)

    w0p, b0p, w3p, b3p = _pack_padded_weights(params, Hp)
    act_dtype = jnp.bfloat16 if _bf16_epilogue_ok() else jnp.float32

    # ---- scoped-VMEM budget: computed, not a fixed blanket request ----------
    w_bytes = sum(int(a.size) * a.dtype.itemsize
                  for a in (w0p, b0p, w3p, b3p) if a is not None)
    io_bytes = 2 * tile_m * (Cin * x.dtype.itemsize            # dbl-buffered input
                             + Hp * jnp.dtype(out_dtype).itemsize)  # dbl-buffered out
    tmp_bytes = tile_m * Hp * 4 * 5          # f32 act + (tile_m,3Hp) matmul + slack
    vmem_need = 2 * w_bytes + io_bytes + tmp_bytes
    vmem_limit = None if vmem_need <= (12 << 20) else int(vmem_need + (4 << 20))
    compiler_params = pltpu.CompilerParams(
        dimension_semantics=("parallel",),
        vmem_limit_bytes=vmem_limit,
    )

    if w3p is None:                          # num_layer == 1: k=1 conv only
        out2d = pl.pallas_call(
            _conv1x1_tanh_kernel,
            out_shape=jax.ShapeDtypeStruct((M, Hp), out_dtype),
            grid=grid,
            in_specs=[
                pl.BlockSpec((tile_m, Cin), lambda i: (i, 0)),
                pl.BlockSpec((Cin, Hp), lambda i: (0, 0)),
                pl.BlockSpec((1, Hp), lambda i: (0, 0)),
            ],
            out_specs=pl.BlockSpec((tile_m, Hp), lambda i: (i, 0)),
            compiler_params=compiler_params,
        )(x2d, w0p, b0p)
    else:
        L1 = w3p.shape[0]
        out2d = pl.pallas_call(
            functools.partial(_fused_cnn_kernel, seq_len=S, act_dtype=act_dtype),
            out_shape=jax.ShapeDtypeStruct((M, Hp), out_dtype),
            grid=grid,
            in_specs=[
                pl.BlockSpec((tile_m, Cin), lambda i: (i, 0)),
                # Weights/biases: same full block every grid step (fetched once,
                # VMEM resident across all row tiles).
                pl.BlockSpec((Cin, Hp), lambda i: (0, 0)),
                pl.BlockSpec((1, Hp), lambda i: (0, 0)),
                pl.BlockSpec((L1, Hp, 3 * Hp), lambda i: (0, 0, 0)),
                pl.BlockSpec((L1, 1, Hp), lambda i: (0, 0, 0)),
            ],
            out_specs=pl.BlockSpec((tile_m, Hp), lambda i: (i, 0)),
            compiler_params=compiler_params,
        )(x2d, w0p, b0p, w3p, b3p)

    out2d = out2d if Hp == H else out2d[:, :H]   # drop the zero padding columns
    return out2d.reshape(B, S, H)


def init_cnn_params(key, input_dim, hidden_dim, num_layer, *, weight_dtype=jnp.bfloat16):
    """PyTorch-Conv1d-shaped init, stored pre-transposed for `x @ W` matmuls.

    Weights are stored in `weight_dtype` (bf16 default); biases stay f32 and the
    bias-add always runs in f32 inside the kernel.
    k=3 weights are kept as separate taps (L-1, 3, H, H); the forward wrapper
    zero-pads the hidden dim to a multiple of 128 and packs [Wl|Wc|Wr] slabs.
    """
    k0, kb0, key = jax.random.split(key, 3)
    bound0 = 1.0 / math.sqrt(input_dim * 1)
    w0 = jax.random.uniform(k0, (hidden_dim, input_dim, 1), jnp.float32, -bound0, bound0)
    b0 = jax.random.uniform(kb0, (hidden_dim,), jnp.float32, -bound0, bound0)
    params = {
        "w0": jnp.transpose(w0[:, :, 0]).astype(weight_dtype),   # (Cin, H)
        "b0": b0.reshape(1, hidden_dim),                         # (1, H) f32
        "w3": None,
        "b3": None,
    }
    if num_layer > 1:
        bound = 1.0 / math.sqrt(hidden_dim * 3)
        w_taps, b_rows = [], []
        for _ in range(num_layer - 1):
            kw, kb, key = jax.random.split(key, 3)
            w = jax.random.uniform(kw, (hidden_dim, hidden_dim, 3), jnp.float32, -bound, bound)
            b = jax.random.uniform(kb, (hidden_dim,), jnp.float32, -bound, bound)
            # Conv1d(padding=1): tap k=0 hits x[t-1], k=1 hits x[t], k=2 hits x[t+1].
            w_taps.append(jnp.stack([jnp.transpose(w[:, :, k]) for k in range(3)]))
            b_rows.append(b.reshape(1, hidden_dim))
        params["w3"] = jnp.stack(w_taps).astype(weight_dtype)    # (L-1, 3, H, H)
        params["b3"] = jnp.stack(b_rows)                         # (L-1, 1, H) f32
    return params


def cnn_model_reference(params, x):
    """Pure-JAX f32 reference mirroring CNN_Model.forward (eval mode)."""
    w0 = params["w0"].astype(jnp.float32)
    act = jnp.tanh(jnp.einsum("bsc,ch->bsh", x, w0) + params["b0"])
    if params.get("w3") is not None:
        for layer in range(params["w3"].shape[0]):
            w = params["w3"][layer].astype(jnp.float32)          # (3, H, H)
            zl = jnp.einsum("bsh,hk->bsk", act, w[0])
            zc = jnp.einsum("bsh,hk->bsk", act, w[1])
            zr = jnp.einsum("bsh,hk->bsk", act, w[2])
            left = jnp.pad(zl[:, :-1], ((0, 0), (1, 0), (0, 0)))  # x[t-1] tap
            right = jnp.pad(zr[:, 1:], ((0, 0), (0, 1), (0, 0)))  # x[t+1] tap
            act = jnp.tanh(left + zc + right + params["b3"][layer])
    return act


# ---------------------------------- main ------------------------------------- #

if __name__ == "__main__":
    B, S, input_dim, hidden_dim, num_layer = 2, 8, 4, 32, 3

    key = jax.random.PRNGKey(0)
    kx, kp = jax.random.split(key)
    x = jax.random.normal(kx, (B, S, input_dim), dtype=jnp.float32)
    params = init_cnn_params(kp, input_dim, hidden_dim, num_layer)

    out = cnn_model_forward(params, x)
    jax.block_until_ready(out)
    assert out.shape == (B, S, hidden_dim), out.shape

    # Correctness vs the pure-JAX f32 reference; tolerance covers the in-kernel
    # bf16 weight/activation quantization (realistic error here is ~1e-2).
    ref = cnn_model_reference(params, x)
    max_err = float(jnp.max(jnp.abs(out - ref)))
    assert max_err < 7e-2, f"kernel/reference mismatch: max|err|={max_err}"

    print("KERNEL_OK")
</pallas_src>

<mosaic_0001>
module attributes {stable_mosaic.version = 11 : i64} {
  func.func @_fused_cnn_kernel(%arg0: i32, %arg1: memref<8x4xf32, #tpu.memory_space<vmem>>, %arg2: memref<4x128xbf16, #tpu.memory_space<vmem>>, %arg3: memref<1x128xf32, #tpu.memory_space<vmem>>, %arg4: memref<2x128x384xbf16, #tpu.memory_space<vmem>>, %arg5: memref<2x1x128xf32, #tpu.memory_space<vmem>>, %arg6: memref<8x128xf32, #tpu.memory_space<vmem>>) attributes {dimension_semantics = [#tpu.dimension_semantics<parallel>], iteration_bounds = array<i64: 2>, scalar_prefetch = 0 : i64, scratch_operands = 0 : i64, tpu.core_type = #tpu.core_type<tc>, window_params = [{transform_indices = @transform_0, window_bounds = array<i64: 8, 4>}, {pipeline_mode = #tpu.pipeline_mode<synchronous>, transform_indices = @transform_1, window_bounds = array<i64: 4, 128>}, {pipeline_mode = #tpu.pipeline_mode<synchronous>, transform_indices = @transform_2, window_bounds = array<i64: 1, 128>}, {pipeline_mode = #tpu.pipeline_mode<synchronous>, transform_indices = @transform_3, window_bounds = array<i64: 2, 128, 384>}, {pipeline_mode = #tpu.pipeline_mode<synchronous>, transform_indices = @transform_4, window_bounds = array<i64: 2, 1, 128>}, {transform_indices = @transform_5, window_bounds = array<i64: 8, 128>}]} {
    %c0 = arith.constant 0 : index
    %c0_0 = arith.constant 0 : index
    %0 = vector.load %arg1[%c0, %c0_0] : memref<8x4xf32, #tpu.memory_space<vmem>>, vector<8x4xf32>
    %1 = arith.truncf %0 : vector<8x4xf32> to vector<8x4xbf16>
    %c0_1 = arith.constant 0 : index
    %c0_2 = arith.constant 0 : index
    %2 = vector.load %arg2[%c0_1, %c0_2] : memref<4x128xbf16, #tpu.memory_space<vmem>>, vector<4x128xbf16>
    %cst = arith.constant dense<0.000000e+00> : vector<8x128xf32>
    %3 = tpu.matmul %1, %2, %cst {dimension_numbers = #tpu.dot_dimension_numbers<[1], [0], [0], [1], [0, 0, 1, 1], [], []>} : vector<8x4xbf16>, vector<4x128xbf16>, vector<8x128xf32> -> vector<8x128xf32>
    %c0_3 = arith.constant 0 : index
    %c0_4 = arith.constant 0 : index
    %4 = vector.load %arg3[%c0_3, %c0_4] : memref<1x128xf32, #tpu.memory_space<vmem>>, vector<1x128xf32>
    %5 = vector.broadcast %4 : vector<1x128xf32> to vector<8x128xf32>
    %6 = arith.addf %3, %5 : vector<8x128xf32>
    %7 = math.tanh %6 : vector<8x128xf32>
    %8 = tpu.iota {dimensions = array<i32: 0>} : vector<8x1xi32>
    %c8_i32 = arith.constant 8 : i32
    %c0_i32 = arith.constant 0 : i32
    %9 = arith.cmpi eq, %c8_i32, %c0_i32 : i32
    %c1_i32 = arith.constant 1 : i32
    %10 = arith.select %9, %c1_i32, %c8_i32 : i32
    %11 = vector.broadcast %10 : i32 to vector<8x1xi32>
    %12 = arith.remsi %8, %11 : vector<8x1xi32>
    %c0_i32_5 = arith.constant 0 : i32
    %13 = vector.broadcast %c0_i32_5 : i32 to vector<8x1xi32>
    %14 = arith.cmpi ne, %12, %13 : vector<8x1xi32>
    %c0_i32_6 = arith.constant 0 : i32
    %15 = vector.broadcast %c0_i32_6 : i32 to vector<8x1xi32>
    %16 = arith.cmpi slt, %12, %15 : vector<8x1xi32>
    %c0_i32_7 = arith.constant 0 : i32
    %17 = arith.cmpi slt, %10, %c0_i32_7 : i32
    %18 = vector.broadcast %17 : i1 to vector<8x1xi1>
    %19 = vector.broadcast %18 : vector<8x1xi1> to vector<8x1xi1>
    %20 = arith.xori %16, %19 : vector<8x1xi1>
    %21 = arith.andi %20, %14 : vector<8x1xi1>
    %22 = vector.broadcast %10 : i32 to vector<8x1xi32>
    %23 = arith.addi %12, %22 : vector<8x1xi32>
    %24 = arith.select %21, %23, %12 : vector<8x1xi1>, vector<8x1xi32>
    %c0_i32_8 = arith.constant 0 : i32
    %25 = vector.broadcast %c0_i32_8 : i32 to vector<8x1xi32>
    %26 = arith.cmpi ne, %24, %25 : vector<8x1xi32>
    %c7_i32 = arith.constant 7 : i32
    %27 = vector.broadcast %c7_i32 : i32 to vector<8x1xi32>
    %28 = arith.cmpi ne, %24, %27 : vector<8x1xi32>
    %29 = arith.truncf %7 : vector<8x128xf32> to vector<8x128xbf16>
    %c0_9 = arith.constant 0 : index
    %c0_10 = arith.constant 0 : index
    %c0_11 = arith.constant 0 : index
    %30 = vector.load %arg4[%c0_9, %c0_10, %c0_11] : memref<2x128x384xbf16, #tpu.memory_space<vmem>>, vector<1x128x384xbf16>
    %31 = vector.shape_cast %30 : vector<1x128x384xbf16> to vector<128x384xbf16>
    %cst_12 = arith.constant dense<0.000000e+00> : vector<8x384xf32>
    %32 = tpu.matmul %29, %31, %cst_12 {dimension_numbers = #tpu.dot_dimension_numbers<[1], [0], [0], [1], [0, 0, 1, 1], [], []>} : vector<8x128xbf16>, vector<128x384xbf16>, vector<8x384xf32> -> vector<8x384xf32>
    %33 = vector.extract_strided_slice %32 {offsets = [0, 0], sizes = [8, 128], strides = [1, 1]} : vector<8x384xf32> to vector<8x128xf32>
    %34 = vector.extract_strided_slice %32 {offsets = [0, 128], sizes = [8, 128], strides = [1, 1]} : vector<8x384xf32> to vector<8x128xf32>
    %35 = vector.extract_strided_slice %32 {offsets = [0, 256], sizes = [8, 128], strides = [1, 1]} : vector<8x384xf32> to vector<8x128xf32>
    %c1_i32_13 = arith.constant 1 : i32
    %36 = tpu.dynamic_rotate %33 by %c1_i32_13 dim 0 : vector<8x128xf32>, i32 -> vector<8x128xf32>
    %cst_14 = arith.constant 0.000000e+00 : f32
    %37 = vector.shape_cast %26 : vector<8x1xi1> to vector<8x1xi1>
    %38 = vector.broadcast %37 : vector<8x1xi1> to vector<8x128xi1>
    %39 = vector.broadcast %cst_14 : f32 to vector<8x128xf32>
    %40 = arith.select %38, %36, %39 : vector<8x128xi1>, vector<8x128xf32>
    %c7_i32_15 = arith.constant 7 : i32
    %41 = tpu.dynamic_rotate %35 by %c7_i32_15 dim 0 : vector<8x128xf32>, i32 -> vector<8x128xf32>
    %cst_16 = arith.constant 0.000000e+00 : f32
    %42 = vector.shape_cast %28 : vector<8x1xi1> to vector<8x1xi1>
    %43 = vector.broadcast %42 : vector<8x1xi1> to vector<8x128xi1>
    %44 = vector.broadcast %cst_16 : f32 to vector<8x128xf32>
    %45 = arith.select %43, %41, %44 : vector<8x128xi1>, vector<8x128xf32>
    %46 = arith.addf %40, %34 : vector<8x128xf32>
    %47 = arith.addf %46, %45 : vector<8x128xf32>
    %c0_17 = arith.constant 0 : index
    %c0_18 = arith.constant 0 : index
    %c0_19 = arith.constant 0 : index
    %48 = vector.load %arg5[%c0_17, %c0_18, %c0_19] : memref<2x1x128xf32, #tpu.memory_space<vmem>>, vector<1x1x128xf32>
    %49 = vector.shape_cast %48 : vector<1x1x128xf32> to vector<1x128xf32>
    %50 = vector.broadcast %49 : vector<1x128xf32> to vector<8x128xf32>
    %51 = arith.addf %47, %50 : vector<8x128xf32>
    %52 = math.tanh %51 : vector<8x128xf32>
    %53 = arith.truncf %52 : vector<8x128xf32> to vector<8x128xbf16>
    %c1 = arith.constant 1 : index
    %c0_20 = arith.constant 0 : index
    %c0_21 = arith.constant 0 : index
    %54 = vector.load %arg4[%c1, %c0_20, %c0_21] : memref<2x128x384xbf16, #tpu.memory_space<vmem>>, vector<1x128x384xbf16>
    %55 = vector.shape_cast %54 : vector<1x128x384xbf16> to vector<128x384xbf16>
    %cst_22 = arith.constant dense<0.000000e+00> : vector<8x384xf32>
    %56 = tpu.matmul %53, %55, %cst_22 {dimension_numbers = #tpu.dot_dimension_numbers<[1], [0], [0], [1], [0, 0, 1, 1], [], []>} : vector<8x128xbf16>, vector<128x384xbf16>, vector<8x384xf32> -> vector<8x384xf32>
    %57 = vector.extract_strided_slice %56 {offsets = [0, 0], sizes = [8, 128], strides = [1, 1]} : vector<8x384xf32> to vector<8x128xf32>
    %58 = vector.extract_strided_slice %56 {offsets = [0, 128], sizes = [8, 128], strides = [1, 1]} : vector<8x384xf32> to vector<8x128xf32>
    %59 = vector.extract_strided_slice %56 {offsets = [0, 256], sizes = [8, 128], strides = [1, 1]} : vector<8x384xf32> to vector<8x128xf32>
    %c1_i32_23 = arith.constant 1 : i32
    %60 = tpu.dynamic_rotate %57 by %c1_i32_23 dim 0 : vector<8x128xf32>, i32 -> vector<8x128xf32>
    %cst_24 = arith.constant 0.000000e+00 : f32
    %61 = vector.shape_cast %26 : vector<8x1xi1> to vector<8x1xi1>
    %62 = vector.broadcast %61 : vector<8x1xi1> to vector<8x128xi1>
    %63 = vector.broadcast %cst_24 : f32 to vector<8x128xf32>
    %64 = arith.select %62, %60, %63 : vector<8x128xi1>, vector<8x128xf32>
    %c7_i32_25 = arith.constant 7 : i32
    %65 = tpu.dynamic_rotate %59 by %c7_i32_25 dim 0 : vector<8x128xf32>, i32 -> vector<8x128xf32>
    %cst_26 = arith.constant 0.000000e+00 : f32
    %66 = vector.shape_cast %28 : vector<8x1xi1> to vector<8x1xi1>
    %67 = vector.broadcast %66 : vector<8x1xi1> to vector<8x128xi1>
    %68 = vector.broadcast %cst_26 : f32 to vector<8x128xf32>
    %69 = arith.select %67, %65, %68 : vector<8x128xi1>, vector<8x128xf32>
    %70 = arith.addf %64, %58 : vector<8x128xf32>
    %71 = arith.addf %70, %69 : vector<8x128xf32>
    %c1_27 = arith.constant 1 : index
    %c0_28 = arith.constant 0 : index
    %c0_29 = arith.constant 0 : index
    %72 = vector.load %arg5[%c1_27, %c0_28, %c0_29] : memref<2x1x128xf32, #tpu.memory_space<vmem>>, vector<1x1x128xf32>
    %73 = vector.shape_cast %72 : vector<1x1x128xf32> to vector<1x128xf32>
    %74 = vector.broadcast %73 : vector<1x128xf32> to vector<8x128xf32>
    %75 = arith.addf %71, %74 : vector<8x128xf32>
    %76 = math.tanh %75 : vector<8x128xf32>
    %c0_30 = arith.constant 0 : index
    %c0_31 = arith.constant 0 : index
    %77 = vector.load %arg6[%c0_30, %c0_31] : memref<8x128xf32, #tpu.memory_space<vmem>>, vector<8x128xf32>
    tpu.vector_store %arg6[%c0_30, %c0_31], %76 {strides = array<i32>} : memref<8x128xf32, #tpu.memory_space<vmem>>, vector<8x128xf32>,
    return
  }
  func.func @transform_0(%arg0: i32) -> (i32, i32) {
    %c0_i32 = arith.constant 0 : i32
    %c0_i32_0 = arith.constant 0 : i32
    return %arg0, %c0_i32 : i32, i32
  }
  func.func @transform_1(%arg0: i32) -> (i32, i32) {
    %c0_i32 = arith.constant 0 : i32
    %c0_i32_0 = arith.constant 0 : i32
    %c0_i32_1 = arith.constant 0 : i32
    return %c0_i32, %c0_i32_0 : i32, i32
  }
  func.func @transform_2(%arg0: i32) -> (i32, i32) {
    %c0_i32 = arith.constant 0 : i32
    %c0_i32_0 = arith.constant 0 : i32
    %c0_i32_1 = arith.constant 0 : i32
    return %c0_i32, %c0_i32_0 : i32, i32
  }
  func.func @transform_3(%arg0: i32) -> (i32, i32, i32) {
    %c0_i32 = arith.constant 0 : i32
    %c0_i32_0 = arith.constant 0 : i32
    %c0_i32_1 = arith.constant 0 : i32
    %c0_i32_2 = arith.constant 0 : i32
    return %c0_i32, %c0_i32_0, %c0_i32_1 : i32, i32, i32
  }
  func.func @transform_4(%arg0: i32) -> (i32, i32, i32) {
    %c0_i32 = arith.constant 0 : i32
    %c0_i32_0 = arith.constant 0 : i32
    %c0_i32_1 = arith.constant 0 : i32
    %c0_i32_2 = arith.constant 0 : i32
    return %c0_i32, %c0_i32_0, %c0_i32_1 : i32, i32, i32
  }
  func.func @transform_5(%arg0: i32) -> (i32, i32) {
    %c0_i32 = arith.constant 0 : i32
    %c0_i32_0 = arith.constant 0 : i32
    return %arg0, %c0_i32 : i32, i32
  }
}

</mosaic_0001>

<llo_original>
// kernel: tpu_custom_call.1
$region0: #{tpu_custom_call.1}
  #allocation0 [shape = 'u32[]', space=smem, size = 0x4, offset = 0x4, fixed_abs, tag = 'smem constant byte address 0x4 - core index']
  #allocation1 [shape = 'u32[144,128]{1,0:T(1,128)}', space=vmem, size = 0x12000, scoped, tag = 'internal scratch']
  %s0 = inlined_call_operand.vmem [shape: f32[16,4], index: 0, kind: input, shape index: {}]
  %s1 = inlined_call_operand.vmem [shape: bf16[4,128], index: 1, kind: input, shape index: {}]
  %s2 = inlined_call_operand.vmem [shape: f32[1,128], index: 2, kind: input, shape index: {}]
  %s3 = inlined_call_operand.hbm [shape: bf16[2,128,384], index: 3, kind: input, shape index: {}]
  %s4 = inlined_call_operand.vmem [shape: f32[2,1,128], index: 4, kind: input, shape index: {}]
  %s5 = inlined_call_operand.hbm [shape: f32[16,128], index: 5, kind: output, shape index: {}]
  %s6 = sld [smem:[#allocation0]]
  $region57: #{tpu_custom_call.1} parent=0
    _
  %s8 = ssub.s32 1, %s6
  %s9 = scalar_select 0, %s8, %s6
  $region1: #{tpu_custom_call.1} parent=0
    #allocation2 [shape = 'u8[196608]{0}', space=vmem, size = 0x30000, scoped, tag = 'input window, operand 3, single buffered']
    #allocation3 [shape = 's32[2]{0}', space=sflag, size = 0x8, scoped, tag = 'scoped memory for tpu_custom_call.1']
    #allocation4 [shape = 's32[2]{0}', space=sflag, size = 0x8, scoped, tag = 'scoped memory for tpu_custom_call.1']
    #allocation5 [shape = 'u8[8192]{0}', space=vmem, size = 0x2000, scoped, tag = 'output window, operand 0']
    %10 = vsyncpa [#allocation3], 0
    %11 = vsyncpa [#allocation4], 0
    %s12 = scalar_lea.sflag [#allocation4], 1
    %13 = vsyncpa %s12, 0
    loop: start=0, step=1, limit=4
    $region2: #{tpu_custom_call.1} parent=1 // loop_pre_header
      _
    $region3: #{tpu_custom_call.1} parent=1 // loop_header
      %s15 = sphi 0, %s19
      %p16 = scmp.ge.s32.totalorder %s15, 4
      %s25 = sphi 0, %s27
      %s28 = sphi 0, %s25
      %s29 = sphi 0, %s28
      %s45 = sphi 0, %s29
      %s49 = sphi 0, %s49
      %s51 = sphi 0, %s49
      %s52 = sphi 0, %s51
      %s66 = sphi 0, %s52
      %s70 = sphi 0, %s70
      %s72 = sphi 0, %s70
      %s73 = sphi 0, %s72
      %s87 = sphi 0, %s73
      %s91 = sphi 0, %s91
      %s93 = sphi 0, %s91
      %s94 = sphi 0, %s93
      %s108 = sphi 0, %s94
      %s112 = sphi 0, %s112
      %s114 = sphi 0, %s112
      %s115 = sphi 0, %s114
      %s129 = sphi 0, %s115
      %s135 = sphi 0, %s137
      %s138 = sphi 0, %s135
      %s139 = sphi 0, %s138
      %s155 = sphi 0, %s139
    $region4: #{tpu_custom_call.1} parent=1 // loop_header_branch
      %18 = sbr.rel (%p16) target = $region8
    $region5: #{tpu_custom_call.1} parent=1 // loop_body
      %s20 = ssub.s32 %s15, 1
      %s21 = ssub.s32 %s15, 2
      %s22 = sadd.s32 %s15, 1
      %s23 = ssub.s32 %s15, %s22
      %p24 = scmp.eq.s32.totalorder %s23, 0
      %s26 = sadd.s32 %s25, 1
      %s27 = scalar_select %p24, %s25, %s26
      %p30 = pneg %p24
      %p31 = scmp.eq.s32.totalorder %s15, 1
      %p32 = por %p30, %p31
      %p33 = scmp.ne.s32.totalorder %s25, %s28
      %p34 = scmp.eq.s32.totalorder %s15, 0
      %p35 = por %p33, %p34
      %p36 = scmp.ne.s32.totalorder %s25, %s28
      %p37 = scmp.eq.s32.totalorder %s20, 1
      %p38 = por %p36, %p37
      %p39 = scmp.ne.s32.totalorder %s28, %s29
      %p40 = scmp.eq.s32.totalorder %s20, 0
      %p41 = por %p39, %p40
      %p42 = scmp.ne.s32.totalorder %s28, %s29
      %p43 = scmp.eq.s32.totalorder %s21, 1
      %p44 = por %p42, %p43
      %p46 = scmp.ne.s32.totalorder %s29, %s45
      %p47 = scmp.eq.s32.totalorder %s21, 0
      %p48 = por %p46, %p47
      %s50 = sadd.s32 %s49, 1
      %p53 = scmp.eq.s32.totalorder %s15, 1
      %p54 = scmp.ne.s32.totalorder %s49, %s51
      %p55 = scmp.eq.s32.totalorder %s15, 0
      %p56 = por %p54, %p55
      %p57 = scmp.ne.s32.totalorder %s49, %s51
      %p58 = scmp.eq.s32.totalorder %s20, 1
      %p59 = por %p57, %p58
      %p60 = scmp.ne.s32.totalorder %s51, %s52
      %p61 = scmp.eq.s32.totalorder %s20, 0
      %p62 = por %p60, %p61
      %p63 = scmp.ne.s32.totalorder %s51, %s52
      %p64 = scmp.eq.s32.totalorder %s21, 1
      %p65 = por %p63, %p64
      %p67 = scmp.ne.s32.totalorder %s52, %s66
      %p68 = scmp.eq.s32.totalorder %s21, 0
      %p69 = por %p67, %p68
      %s71 = sadd.s32 %s70, 1
      %p74 = scmp.eq.s32.totalorder %s15, 1
      %p75 = scmp.ne.s32.totalorder %s70, %s72
      %p76 = scmp.eq.s32.totalorder %s15, 0
      %p77 = por %p75, %p76
      %p78 = scmp.ne.s32.totalorder %s70, %s72
      %p79 = scmp.eq.s32.totalorder %s20, 1
      %p80 = por %p78, %p79
      %p81 = scmp.ne.s32.totalorder %s72, %s73
      %p82 = scmp.eq.s32.totalorder %s20, 0
      %p83 = por %p81, %p82
      %p84 = scmp.ne.s32.totalorder %s72, %s73
      %p85 = scmp.eq.s32.totalorder %s21, 1
      %p86 = por %p84, %p85
      %p88 = scmp.ne.s32.totalorder %s73, %s87
      %p89 = scmp.eq.s32.totalorder %s21, 0
      %p90 = por %p88, %p89
      %s92 = sadd.s32 %s91, 1
      %p95 = scmp.eq.s32.totalorder %s15, 1
      %p96 = scmp.ne.s32.totalorder %s91, %s93
      %p97 = scmp.eq.s32.totalorder %s15, 0
      %p98 = por %p96, %p97
      %p99 = scmp.ne.s32.totalorder %s91, %s93
      %p100 = scmp.eq.s32.totalorder %s20, 1
      %p101 = por %p99, %p100
      %p102 = scmp.ne.s32.totalorder %s93, %s94
      %p103 = scmp.eq.s32.totalorder %s20, 0
      %p104 = por %p102, %p103
      %p105 = scmp.ne.s32.totalorder %s93, %s94
      %p106 = scmp.eq.s32.totalorder %s21, 1
      %p107 = por %p105, %p106
      %p109 = scmp.ne.s32.totalorder %s94, %s108
      %p110 = scmp.eq.s32.totalorder %s21, 0
      %p111 = por %p109, %p110
      %s113 = sadd.s32 %s112, 1
      %p116 = scmp.eq.s32.totalorder %s15, 1
      %p117 = scmp.ne.s32.totalorder %s112, %s114
      %p118 = scmp.eq.s32.totalorder %s15, 0
      %p119 = por %p117, %p118
      %p120 = scmp.ne.s32.totalorder %s112, %s114
      %p121 = scmp.eq.s32.totalorder %s20, 1
      %p122 = por %p120, %p121
      %p123 = scmp.ne.s32.totalorder %s114, %s115
      %p124 = scmp.eq.s32.totalorder %s20, 0
      %p125 = por %p123, %p124
      %p126 = scmp.ne.s32.totalorder %s114, %s115
      %p127 = scmp.eq.s32.totalorder %s21, 1
      %p128 = por %p126, %p127
      %p130 = scmp.ne.s32.totalorder %s115, %s129
      %p131 = scmp.eq.s32.totalorder %s21, 0
      %p132 = por %p130, %p131
      %s133 = ssub.s32 %s15, %s22
      %p134 = scmp.eq.s32.totalorder %s133, 0
      %s136 = sadd.s32 %s135, 1
      %s137 = scalar_select %p134, %s135, %s136
      %p140 = pneg %p134
      %p141 = scmp.eq.s32.totalorder %s15, 1
      %p142 = por %p140, %p141
      %p143 = scmp.ne.s32.totalorder %s135, %s138
      %p144 = scmp.eq.s32.totalorder %s15, 0
      %p145 = por %p143, %p144
      %p146 = scmp.ne.s32.totalorder %s135, %s138
      %p147 = scmp.eq.s32.totalorder %s20, 1
      %p148 = por %p146, %p147
      %p149 = scmp.ne.s32.totalorder %s138, %s139
      %p150 = scmp.eq.s32.totalorder %s20, 0
      %p151 = por %p149, %p150
      %p152 = scmp.ne.s32.totalorder %s138, %s139
      %p153 = scmp.eq.s32.totalorder %s21, 1
      %p154 = por %p152, %p153
      %p156 = scmp.ne.s32.totalorder %s139, %s155
      %p157 = scmp.eq.s32.totalorder %s21, 0
      %p158 = por %p156, %p157
      %p159 = scmp.le.s32.totalorder 1, %s15
      %p160 = scmp.lt.s32.totalorder %s15, 3
      %p161 = pnand %p159, %p160
      %p162 = pneg %p161
      // Predicated region
      $region9: #{tpu_custom_call.1} parent=5 // pred_check
        _
      $region10: #{tpu_custom_call.1} parent=5 // pred_check_branch
        %164 = sbr.rel (%p161) target = $region12
      $region11: #{tpu_custom_call.1} parent=5 // pred_region
        %s165 = ssub.s32 %s15, 1
        // Predicated region
        $region13: #{tpu_custom_call.1} parent=11 // pred_check
          %p166 = pneg %p62
        $region14: #{tpu_custom_call.1} parent=11 // pred_check_branch
          %168 = sbr.rel (%p166) target = $region16
        $region15: #{tpu_custom_call.1} parent=11 // pred_region
          _
        $region16: #{tpu_custom_call.1} parent=11 // pred_fallthru
          _
        // Predicated region
        $region17: #{tpu_custom_call.1} parent=11 // pred_check
          %p169 = pneg %p83
        $region18: #{tpu_custom_call.1} parent=11 // pred_check_branch
          %171 = sbr.rel (%p169) target = $region20
        $region19: #{tpu_custom_call.1} parent=11 // pred_region
          _
        $region20: #{tpu_custom_call.1} parent=11 // pred_fallthru
          _
        // Predicated region
        $region21: #{tpu_custom_call.1} parent=11 // pred_check
          %p172 = pneg %p104
        $region22: #{tpu_custom_call.1} parent=11 // pred_check_branch
          %174 = sbr.rel (%p172) target = $region24
        $region23: #{tpu_custom_call.1} parent=11 // pred_region
          %s176 = ssub.s32 6144, 6144
          %177 = vsyncadd [#allocation3], %s176
          %s178 = sshll.u32 [#allocation2], 4
          %s179 = int_to_ptr.vmem [resolvable:$true] %s178
          %184 = dma.hbm_to_vmem [thread:$0]  %s3, 6144, %s179, [#allocation3], 192, 192, 12
        $region24: #{tpu_custom_call.1} parent=11 // pred_fallthru
          _
        // Predicated region
        $region25: #{tpu_custom_call.1} parent=11 // pred_check
          %p185 = pneg %p125
        $region26: #{tpu_custom_call.1} parent=11 // pred_check_branch
          %187 = sbr.rel (%p185) target = $region28
        $region27: #{tpu_custom_call.1} parent=11 // pred_region
          _
        $region28: #{tpu_custom_call.1} parent=11 // pred_fallthru
          _
      $region12: #{tpu_custom_call.1} parent=5 // pred_fallthru
        _
      %p188 = scmp.lt.s32.totalorder %s15, 2
      // Predicated region
      $region29: #{tpu_custom_call.1} parent=5 // pred_check
        %p189 = pneg %p188
      $region30: #{tpu_custom_call.1} parent=5 // pred_check_branch
        %191 = sbr.rel (%p189) target = $region32
      $region31: #{tpu_custom_call.1} parent=5 // pred_region
        // Predicated region
        $region33: #{tpu_custom_call.1} parent=31 // pred_check
          %p192 = pneg %p35
        $region34: #{tpu_custom_call.1} parent=31 // pred_check_branch
          %194 = sbr.rel (%p192) target = $region36
        $region35: #{tpu_custom_call.1} parent=31 // pred_region
          %p195 = scmp.lt.s32.totalorder %s15, 1
          %s196 = scalar_select %p195, %s15, 1
          %s197 = smul.addr %s196, 8
          %s198 = scalar_lea.vmem %s0, %s197
        $region36: #{tpu_custom_call.1} parent=31 // pred_fallthru
          _
      $region32: #{tpu_custom_call.1} parent=5 // pred_fallthru
        _
      %p199 = scmp.le.s32.totalorder 1, %s15
      %p200 = scmp.lt.s32.totalorder %s15, 3
      %p201 = pnand %p199, %p200
      %p202 = pneg %p201
      // Predicated region
      $region37: #{tpu_custom_call.1} parent=5 // pred_check
        _
      $region38: #{tpu_custom_call.1} parent=5 // pred_check_branch
        %204 = sbr.rel (%p201) target = $region40
      $region39: #{tpu_custom_call.1} parent=5 // pred_region
        %s205 = ssub.s32 %s15, 1
        // Predicated region
        $region41: #{tpu_custom_call.1} parent=39 // pred_check
          %p206 = pneg %p104
        $region42: #{tpu_custom_call.1} parent=39 // pred_check_branch
          %208 = sbr.rel (%p206) target = $region44
        $region43: #{tpu_custom_call.1} parent=39 // pred_region
          %209 = dma.done [#allocation3], 6144
        $region44: #{tpu_custom_call.1} parent=39 // pred_fallthru
          _
        %p210 = scmp.lt.s32.totalorder %s20, 1
        %s211 = scalar_select %p210, %s20, 1
        %s212 = smul.addr %s211, 8
        %s213 = scalar_lea.vmem %s0, %s212
        %p214 = pneg %p41
        %p215 = pneg %p38
        %p216 = pneg %p62
        %p217 = pneg %p59
        %p218 = pneg %p83
        %p219 = pneg %p80
        %p220 = pneg %p104
        %p221 = pneg %p101
        %p222 = pneg %p125
        %p223 = pneg %p122
        %p224 = pneg %p151
        %p225 = pneg %p148
        %s226 = sand.u32 %s138, 1
        %s227 = scalar_lea.sflag [#allocation4], %s226
        %s228 = sand.u32 %s138, 1
        %s229 = smul.addr %s228, 8
        %s230 = scalar_lea.vmem [#allocation5], %s229
        %p231 = scmp.lt.s32.totalorder %s20, 1
        %s232 = scalar_select %p231, %s20, 1
        %s233 = smul.addr %s232, 8
        %s234 = scalar_lea.vmem %s0, %s233
        %v236 = vld [vmem:[%s234] sm:$0xff]
        %v237 = vpack.c.bf16 %v236, %v236
        %v238 = vld [vmem:[%s1] sm:$0x3]
        %v239 = vld [vmem:[%s2] sm:$0x1]
        %v241 = vlaneseq
        %v242 = vshrl.u32 %v241, 7
        %v243 = vsub.s32 0, %v242
        %v244 = vrot.slane %v239, %v243
        %vm246 = vcmask 31744
        %v248 = vsel %vm246, %v237, 0
        %vm250 = vcmask 1041408
        %v252 = vsel %vm250, %v238, 0
        %254 = vmatprep.subr.bf16.mxu0 0
        %255 = vmatpush1.bf16.msra.mxu0 %v252
        %256 = vmatprep.subr.bf16.mxu0 0
        %257 = vmatpush1.bf16.msra.mxu0 0
        %258 = vmatprep.subr.bf16.mxu0 0
        %259 = vmatpush1.bf16.msra.mxu0 0
        %260 = vmatprep.subr.bf16.mxu0 0
        %261 = vmatpush1.bf16.msra.mxu0 0
        %262 = vmatprep.subr.bf16.mxu0 0
        %263 = vmatpush1.bf16.msra.mxu0 0
        %264 = vmatprep.subr.bf16.mxu0 0
        %265 = vmatpush1.bf16.msra.mxu0 0
        %266 = vmatprep.subr.bf16.mxu0 0
        %267 = vmatpush1.bf16.msra.mxu0 0
        %268 = vmatprep.subr.bf16.mxu0 0
        %269 = vmatpush1.bf16.msra.mxu0 0
        %270 = vmatprep.subr.bf16.mxu0 0
        %271 = vmatpush1.bf16.msra.mxu0 0
        %272 = vmatprep.subr.bf16.mxu0 0
        %273 = vmatpush1.bf16.msra.mxu0 0
        %274 = vmatprep.subr.bf16.mxu0 0
        %275 = vmatpush1.bf16.msra.mxu0 0
        %276 = vmatprep.subr.bf16.mxu0 0
        %277 = vmatpush1.bf16.msra.mxu0 0
        %278 = vmatprep.subr.bf16.mxu0 0
        %279 = vmatpush1.bf16.msra.mxu0 0
        %280 = vmatprep.subr.bf16.mxu0 0
        %281 = vmatpush1.bf16.msra.mxu0 0
        %282 = vmatprep.subr.bf16.mxu0 0
        %283 = vmatpush1.bf16.msra.mxu0 0
        %284 = vmatprep.subr.bf16.mxu0 0
        %285 = vmatpush1.bf16.msra.mxu0 0
        %286 = vmatprep.mubr.bf16.mxu0 0
        %287 = vmatmul.mubr.bf16.gmra.mrb[0].mxu0 %v248
        %v288 = vpop.f32.mrb[0].mxu0
        %v289 = vadd.f32 %v244, %v288
        %v290 = vpop.f32.mrb[0].mxu0
        %v291 = vpop.f32.mrb[0].mxu0
        %v292 = vpop.f32.mrb[0].mxu0
        %293 = vdwg.mxu0
        %v294 = vtanh.pop %v289
        %v295 = vlaneseq
        %v296 = vshrl.u32 %v295, 7
        %vm297 = vcmp.lt.s32.totalorder %v296, 0
        %v298 = vsub.s32 0, %v296
        %v299 = vsel %vm297, %v298, %v296
        %v300 = vshrl.u32 %v299, 3
        %v301 = vand.u32 %v299, 7
        %v302 = vsub.s32 0, %v301
        %v303 = vsel %vm297, %v302, %v301
        %vm304 = vcmp.ne.s32.totalorder %v303, 0
        %vm305 = vcmp.lt.s32.totalorder %v303, 0
        %vm306 = vmand %vm305, %vm304
        %v307 = vadd.s32 %v303, 8
        %v308 = vsel %vm306, %v307, %v303
        %vm309 = vcmp.ne.s32.totalorder %v308, 0
        %vm310 = vcmp.ne.s32.totalorder %v308, 7
        %v311 = vpack.c.bf16 %v294, %v294
        %v312 = vld [vmem:[#allocation2] sm:$0xff]
        %v313 = vld [vmem:[#allocation2 + $0x8] sm:$0xf]
        %v314 = vld [vmem:[#allocation2 + $0xc] sm:$0xff]
        %v315 = vld [vmem:[#allocation2 + $0x14] sm:$0xf]
        %v316 = vld [vmem:[#allocation2 + $0x18] sm:$0xff]
        %v317 = vld [vmem:[#allocation2 + $0x20] sm:$0xf]
        %v318 = vld [vmem:[#allocation2 + $0x24] sm:$0xff]
        %v319 = vld [vmem:[#allocation2 + $0x2c] sm:$0xf]
        %v320 = vld [vmem:[#allocation2 + $0x30] sm:$0xff]
        %v321 = vld [vmem:[#allocation2 + $0x38] sm:$0xf]
        %v322 = vld [vmem:[#allocation2 + $0x3c] sm:$0xff]
        %v323 = vld [vmem:[#allocation2 + $0x44] sm:$0xf]
        %v324 = vld [vmem:[#allocation2 + $0x48] sm:$0xff]
        %v325 = vld [vmem:[#allocation2 + $0x50] sm:$0xf]
        %v326 = vld [vmem:[#allocation2 + $0x54] sm:$0xff]
        %v327 = vld [vmem:[#allocation2 + $0x5c] sm:$0xf]
        %v328 = vld [vmem:[#allocation2 + $0x60] sm:$0xff]
        %v329 = vld [vmem:[#allocation2 + $0x68] sm:$0xf]
        %v330 = vld [vmem:[#allocation2 + $0x6c] sm:$0xff]
        %v331 = vld [vmem:[#allocation2 + $0x74] sm:$0xf]
        %v332 = vld [vmem:[#allocation2 + $0x78] sm:$0xff]
        %v333 = vld [vmem:[#allocation2 + $0x80] sm:$0xf]
        %v334 = vld [vmem:[#allocation2 + $0x84] sm:$0xff]
        %v335 = vld [vmem:[#allocation2 + $0x8c] sm:$0xf]
        %v336 = vld [vmem:[#allocation2 + $0x90] sm:$0xff]
        %v337 = vld [vmem:[#allocation2 + $0x98] sm:$0xf]
        %v338 = vld [vmem:[#allocation2 + $0x9c] sm:$0xff]
        %v339 = vld [vmem:[#allocation2 + $0xa4] sm:$0xf]
        %v340 = vld [vmem:[#allocation2 + $0xa8] sm:$0xff]
        %v341 = vld [vmem:[#allocation2 + $0xb0] sm:$0xf]
        %v342 = vld [vmem:[#allocation2 + $0xb4] sm:$0xff]
        %v343 = vld [vmem:[#allocation2 + $0xbc] sm:$0xf]
        %v376 = vunpack.c.l.b16 %v312
        %v377 = vunpack.c.h.b16 %v312
        %v378 = vunpack.c.l.b16 %v313
        %v379 = vunpack.c.l.b16 %v314
        %v380 = vunpack.c.h.b16 %v314
        %v381 = vunpack.c.l.b16 %v315
        %v382 = vunpack.c.l.b16 %v316
        %v383 = vunpack.c.h.b16 %v316
        %v384 = vunpack.c.l.b16 %v317
        %v385 = vunpack.c.l.b16 %v318
        %v386 = vunpack.c.h.b16 %v318
        %v387 = vunpack.c.l.b16 %v319
        %v388 = vunpack.c.l.b16 %v320
        %v389 = vunpack.c.h.b16 %v320
        %v390 = vunpack.c.l.b16 %v321
        %v391 = vunpack.c.l.b16 %v322
        %v392 = vunpack.c.h.b16 %v322
        %v393 = vunpack.c.l.b16 %v323
        %v394 = vunpack.c.l.b16 %v324
        %v395 = vunpack.c.h.b16 %v324
        %v396 = vunpack.c.l.b16 %v325
        %v397 = vunpack.c.l.b16 %v326
        %v398 = vunpack.c.h.b16 %v326
        %v399 = vunpack.c.l.b16 %v327
        %v400 = vunpack.c.l.b16 %v328
        %v401 = vunpack.c.h.b16 %v328
        %v402 = vunpack.c.l.b16 %v329
        %v403 = vunpack.c.l.b16 %v330
        %v404 = vunpack.c.h.b16 %v330
        %v405 = vunpack.c.l.b16 %v331
        %v406 = vunpack.c.l.b16 %v332
        %v407 = vunpack.c.h.b16 %v332
        %v408 = vunpack.c.l.b16 %v333
        %v409 = vunpack.c.l.b16 %v334
        %v410 = vunpack.c.h.b16 %v334
        %v411 = vunpack.c.l.b16 %v335
        %v412 = vunpack.c.l.b16 %v336
        %v413 = vunpack.c.h.b16 %v336
        %v414 = vunpack.c.l.b16 %v337
        %v415 = vunpack.c.l.b16 %v338
        %v416 = vunpack.c.h.b16 %v338
        %v417 = vunpack.c.l.b16 %v339
        %v418 = vunpack.c.l.b16 %v340
        %v419 = vunpack.c.h.b16 %v340
        %v420 = vunpack.c.l.b16 %v341
        %v421 = vunpack.c.l.b16 %v342
        %v422 = vunpack.c.h.b16 %v342
        %v423 = vunpack.c.l.b16 %v343
        %v424 = vpack.c.b16 %v379, %v376
        %v425 = vpack.c.b16 %v380, %v377
        %v426 = vpack.c.b16 %v381, %v378
        %v427 = vpack.c.b16 %v385, %v382
        %v428 = vpack.c.b16 %v386, %v383
        %v429 = vpack.c.b16 %v387, %v384
        %v430 = vpack.c.b16 %v391, %v388
        %v431 = vpack.c.b16 %v392, %v389
        %v432 = vpack.c.b16 %v393, %v390
        %v433 = vpack.c.b16 %v397, %v394
        %v434 = vpack.c.b16 %v398, %v395
        %v435 = vpack.c.b16 %v399, %v396
        %v436 = vpack.c.b16 %v403, %v400
        %v437 = vpack.c.b16 %v404, %v401
        %v438 = vpack.c.b16 %v405, %v402
        %v439 = vpack.c.b16 %v409, %v406
        %v440 = vpack.c.b16 %v410, %v407
        %v441 = vpack.c.b16 %v411, %v408
        %v442 = vpack.c.b16 %v415, %v412
        %v443 = vpack.c.b16 %v416, %v413
        %v444 = vpack.c.b16 %v417, %v414
        %v445 = vpack.c.b16 %v421, %v418
        %v446 = vpack.c.b16 %v422, %v419
        %v447 = vpack.c.b16 %v423, %v420
        %472 = vmatprep.subr.bf16.mxu0 %v425
        %473 = vmatpush1.bf16.msra.mxu0 %v424
        %474 = vmatprep.subr.bf16.mxu0 %v428
        %475 = vmatpush1.bf16.msra.mxu0 %v427
        %476 = vmatprep.subr.bf16.mxu0 %v431
        %477 = vmatpush1.bf16.msra.mxu0 %v430
        %478 = vmatprep.subr.bf16.mxu0 %v434
        %479 = vmatpush1.bf16.msra.mxu0 %v433
        %480 = vmatprep.subr.bf16.mxu0 %v437
        %481 = vmatpush1.bf16.msra.mxu0 %v436
        %482 = vmatprep.subr.bf16.mxu0 %v440
        %483 = vmatpush1.bf16.msra.mxu0 %v439
        %484 = vmatprep.subr.bf16.mxu0 %v443
        %485 = vmatpush1.bf16.msra.mxu0 %v442
        %486 = vmatprep.subr.bf16.mxu0 %v446
        %487 = vmatpush1.bf16.msra.mxu0 %v445
        %488 = vmatprep.subr.bf16.mxu0 0
        %489 = vmatpush1.bf16.msra.mxu0 0
        %490 = vmatprep.subr.bf16.mxu0 0
        %491 = vmatpush1.bf16.msra.mxu0 0
        %492 = vmatprep.subr.bf16.mxu0 0
        %493 = vmatpush1.bf16.msra.mxu0 0
        %494 = vmatprep.subr.bf16.mxu0 0
        %495 = vmatpush1.bf16.msra.mxu0 0
        %496 = vmatprep.subr.bf16.mxu0 0
        %497 = vmatpush1.bf16.msra.mxu0 0
        %498 = vmatprep.subr.bf16.mxu0 0
        %499 = vmatpush1.bf16.msra.mxu0 0
        %500 = vmatprep.subr.bf16.mxu0 0
        %501 = vmatpush1.bf16.msra.mxu0 0
        %502 = vmatprep.subr.bf16.mxu0 0
        %503 = vmatpush1.bf16.msra.mxu0 0
        %504 = vmatprep.mubr.bf16.mxu0 0
        %505 = vmatmul.mubr.bf16.gmra.mrb[0].mxu0 %v311
        %v506 = vpop.f32.mrb[0].mxu0
        %v507 = vadd.f32 0.0, %v506
        %v508 = vpop.f32.mrb[0].mxu0
        %v509 = vadd.f32 0.0, %v508
        %v510 = vpop.f32.mrb[0].mxu0
        %v511 = vpop.f32.mrb[0].mxu0
        %512 = vdwg.mxu0
        %513 = vmatprep.subr.bf16.mxu0 0
        %514 = vmatpush1.bf16.msra.mxu0 %v426
        %515 = vmatprep.subr.bf16.mxu0 0
        %516 = vmatpush1.bf16.msra.mxu0 %v429
        %517 = vmatprep.subr.bf16.mxu0 0
        %518 = vmatpush1.bf16.msra.mxu0 %v432
        %519 = vmatprep.subr.bf16.mxu0 0
        %520 = vmatpush1.bf16.msra.mxu0 %v435
        %521 = vmatprep.subr.bf16.mxu0 0
        %522 = vmatpush1.bf16.msra.mxu0 %v438
        %523 = vmatprep.subr.bf16.mxu0 0
        %524 = vmatpush1.bf16.msra.mxu0 %v441
        %525 = vmatprep.subr.bf16.mxu0 0
        %526 = vmatpush1.bf16.msra.mxu0 %v444
        %527 = vmatprep.subr.bf16.mxu0 0
        %528 = vmatpush1.bf16.msra.mxu0 %v447
        %529 = vmatprep.subr.bf16.mxu0 0
        %530 = vmatpush1.bf16.msra.mxu0 0
        %531 = vmatprep.subr.bf16.mxu0 0
        %532 = vmatpush1.bf16.msra.mxu0 0
        %533 = vmatprep.subr.bf16.mxu0 0
        %534 = vmatpush1.bf16.msra.mxu0 0
        %535 = vmatprep.subr.bf16.mxu0 0
        %536 = vmatpush1.bf16.msra.mxu0 0
        %537 = vmatprep.subr.bf16.mxu0 0
        %538 = vmatpush1.bf16.msra.mxu0 0
        %539 = vmatprep.subr.bf16.mxu0 0
        %540 = vmatpush1.bf16.msra.mxu0 0
        %541 = vmatprep.subr.bf16.mxu0 0
        %542 = vmatpush1.bf16.msra.mxu0 0
        %543 = vmatprep.subr.bf16.mxu0 0
        %544 = vmatpush1.bf16.msra.mxu0 0
        %545 = vmatprep.mubr.bf16.mxu0 0
        %546 = vmatmul.mubr.bf16.gmra.mrb[0].mxu0 %v311
        %v547 = vpop.f32.mrb[0].mxu0
        %v548 = vadd.f32 0.0, %v547
        %v549 = vpop.f32.mrb[0].mxu0
        %v550 = vpop.f32.mrb[0].mxu0
        %v551 = vpop.f32.mrb[0].mxu0
        %552 = vdwg.mxu0
        %v553 = vrot.slane %v507, 7
        %v554 = vsel %vm309, 1, 0
        %vm555 = vcmp.eq.s32.totalorder %v554, 1
        %v556 = vsel %vm555, %v553, 0.0
        %v557 = vrot.slane %v548, 1
        %v558 = vsel %vm310, 1, 0
        %vm559 = vcmp.eq.s32.totalorder %v558, 1
        %v560 = vsel %vm559, %v557, 0.0
        %v561 = vadd.f32 %v556, %v509
        %v562 = vadd.f32 %v561, %v560
        %v563 = vld [vmem:[%s4] sm:$0x1]
        %v565 = vlaneseq
        %v566 = vshrl.u32 %v565, 7
        %v567 = vsub.s32 0, %v566
        %v568 = vrot.slane %v563, %v567
        %v570 = vadd.f32 %v562, %v568
        %v571 = vtanh.pop %v570
        %v572 = vpack.c.bf16 %v571, %v571
        %s573 = scalar_lea.vmem [#allocation2], 192
        %v574 = vld [vmem:[%s573] sm:$0xff]
        %v575 = vld [vmem:[%s573 + $0x8] sm:$0xf]
        %v576 = vld [vmem:[%s573 + $0xc] sm:$0xff]
        %v577 = vld [vmem:[%s573 + $0x14] sm:$0xf]
        %v578 = vld [vmem:[%s573 + $0x18] sm:$0xff]
        %v579 = vld [vmem:[%s573 + $0x20] sm:$0xf]
        %v580 = vld [vmem:[%s573 + $0x24] sm:$0xff]
        %v581 = vld [vmem:[%s573 + $0x2c] sm:$0xf]
        %v582 = vld [vmem:[%s573 + $0x30] sm:$0xff]
        %v583 = vld [vmem:[%s573 + $0x38] sm:$0xf]
        %v584 = vld [vmem:[%s573 + $0x3c] sm:$0xff]
        %v585 = vld [vmem:[%s573 + $0x44] sm:$0xf]
        %v586 = vld [vmem:[%s573 + $0x48] sm:$0xff]
        %v587 = vld [vmem:[%s573 + $0x50] sm:$0xf]
        %v588 = vld [vmem:[%s573 + $0x54] sm:$0xff]
        %v589 = vld [vmem:[%s573 + $0x5c] sm:$0xf]
        %v590 = vld [vmem:[%s573 + $0x60] sm:$0xff]
        %v591 = vld [vmem:[%s573 + $0x68] sm:$0xf]
        %v592 = vld [vmem:[%s573 + $0x6c] sm:$0xff]
        %v593 = vld [vmem:[%s573 + $0x74] sm:$0xf]
        %v594 = vld [vmem:[%s573 + $0x78] sm:$0xff]
        %v595 = vld [vmem:[%s573 + $0x80] sm:$0xf]
        %v596 = vld [vmem:[%s573 + $0x84] sm:$0xff]
        %v597 = vld [vmem:[%s573 + $0x8c] sm:$0xf]
        %v598 = vld [vmem:[%s573 + $0x90] sm:$0xff]
        %v599 = vld [vmem:[%s573 + $0x98] sm:$0xf]
        %v600 = vld [vmem:[%s573 + $0x9c] sm:$0xff]
        %v601 = vld [vmem:[%s573 + $0xa4] sm:$0xf]
        %v602 = vld [vmem:[%s573 + $0xa8] sm:$0xff]
        %v603 = vld [vmem:[%s573 + $0xb0] sm:$0xf]
        %v604 = vld [vmem:[%s573 + $0xb4] sm:$0xff]
        %v605 = vld [vmem:[%s573 + $0xbc] sm:$0xf]
        %v638 = vunpack.c.l.b16 %v574
        %v639 = vunpack.c.h.b16 %v574
        %v640 = vunpack.c.l.b16 %v575
        %v641 = vunpack.c.l.b16 %v576
        %v642 = vunpack.c.h.b16 %v576
        %v643 = vunpack.c.l.b16 %v577
        %v644 = vunpack.c.l.b16 %v578
        %v645 = vunpack.c.h.b16 %v578
        %v646 = vunpack.c.l.b16 %v579
        %v647 = vunpack.c.l.b16 %v580
        %v648 = vunpack.c.h.b16 %v580
        %v649 = vunpack.c.l.b16 %v581
        %v650 = vunpack.c.l.b16 %v582
        %v651 = vunpack.c.h.b16 %v582
        %v652 = vunpack.c.l.b16 %v583
        %v653 = vunpack.c.l.b16 %v584
        %v654 = vunpack.c.h.b16 %v584
        %v655 = vunpack.c.l.b16 %v585
        %v656 = vunpack.c.l.b16 %v586
        %v657 = vunpack.c.h.b16 %v586
        %v658 = vunpack.c.l.b16 %v587
        %v659 = vunpack.c.l.b16 %v588
        %v660 = vunpack.c.h.b16 %v588
        %v661 = vunpack.c.l.b16 %v589
        %v662 = vunpack.c.l.b16 %v590
        %v663 = vunpack.c.h.b16 %v590
        %v664 = vunpack.c.l.b16 %v591
        %v665 = vunpack.c.l.b16 %v592
        %v666 = vunpack.c.h.b16 %v592
        %v667 = vunpack.c.l.b16 %v593
        %v668 = vunpack.c.l.b16 %v594
        %v669 = vunpack.c.h.b16 %v594
        %v670 = vunpack.c.l.b16 %v595
        %v671 = vunpack.c.l.b16 %v596
        %v672 = vunpack.c.h.b16 %v596
        %v673 = vunpack.c.l.b16 %v597
        %v674 = vunpack.c.l.b16 %v598
        %v675 = vunpack.c.h.b16 %v598
        %v676 = vunpack.c.l.b16 %v599
        %v677 = vunpack.c.l.b16 %v600
        %v678 = vunpack.c.h.b16 %v600
        %v679 = vunpack.c.l.b16 %v601
        %v680 = vunpack.c.l.b16 %v602
        %v681 = vunpack.c.h.b16 %v602
        %v682 = vunpack.c.l.b16 %v603
        %v683 = vunpack.c.l.b16 %v604
        %v684 = vunpack.c.h.b16 %v604
        %v685 = vunpack.c.l.b16 %v605
        %v686 = vpack.c.b16 %v641, %v638
        %v687 = vpack.c.b16 %v642, %v639
        %v688 = vpack.c.b16 %v643, %v640
        %v689 = vpack.c.b16 %v647, %v644
        %v690 = vpack.c.b16 %v648, %v645
        %v691 = vpack.c.b16 %v649, %v646
        %v692 = vpack.c.b16 %v653, %v650
        %v693 = vpack.c.b16 %v654, %v651
        %v694 = vpack.c.b16 %v655, %v652
        %v695 = vpack.c.b16 %v659, %v656
        %v696 = vpack.c.b16 %v660, %v657
        %v697 = vpack.c.b16 %v661, %v658
        %v698 = vpack.c.b16 %v665, %v662
        %v699 = vpack.c.b16 %v666, %v663
        %v700 = vpack.c.b16 %v667, %v664
        %v701 = vpack.c.b16 %v671, %v668
        %v702 = vpack.c.b16 %v672, %v669
        %v703 = vpack.c.b16 %v673, %v670
        %v704 = vpack.c.b16 %v677, %v674
        %v705 = vpack.c.b16 %v678, %v675
        %v706 = vpack.c.b16 %v679, %v676
        %v707 = vpack.c.b16 %v683, %v680
        %v708 = vpack.c.b16 %v684, %v681
        %v709 = vpack.c.b16 %v685, %v682
        %734 = vmatprep.subr.bf16.mxu0 %v687
        %735 = vmatpush1.bf16.msra.mxu0 %v686
        %736 = vmatprep.subr.bf16.mxu0 %v690
        %737 = vmatpush1.bf16.msra.mxu0 %v689
        %738 = vmatprep.subr.bf16.mxu0 %v693
        %739 = vmatpush1.bf16.msra.mxu0 %v692
        %740 = vmatprep.subr.bf16.mxu0 %v696
        %741 = vmatpush1.bf16.msra.mxu0 %v695
        %742 = vmatprep.subr.bf16.mxu0 %v699
        %743 = vmatpush1.bf16.msra.mxu0 %v698
        %744 = vmatprep.subr.bf16.mxu0 %v702
        %745 = vmatpush1.bf16.msra.mxu0 %v701
        %746 = vmatprep.subr.bf16.mxu0 %v705
        %747 = vmatpush1.bf16.msra.mxu0 %v704
        %748 = vmatprep.subr.bf16.mxu0 %v708
        %749 = vmatpush1.bf16.msra.mxu0 %v707
        %750 = vmatprep.subr.bf16.mxu0 0
        %751 = vmatpush1.bf16.msra.mxu0 0
        %752 = vmatprep.subr.bf16.mxu0 0
        %753 = vmatpush1.bf16.msra.mxu0 0
        %754 = vmatprep.subr.bf16.mxu0 0
        %755 = vmatpush1.bf16.msra.mxu0 0
        %756 = vmatprep.subr.bf16.mxu0 0
        %757 = vmatpush1.bf16.msra.mxu0 0
        %758 = vmatprep.subr.bf16.mxu0 0
        %759 = vmatpush1.bf16.msra.mxu0 0
        %760 = vmatprep.subr.bf16.mxu0 0
        %761 = vmatpush1.bf16.msra.mxu0 0
        %762 = vmatprep.subr.bf16.mxu0 0
        %763 = vmatpush1.bf16.msra.mxu0 0
        %764 = vmatprep.subr.bf16.mxu0 0
        %765 = vmatpush1.bf16.msra.mxu0 0
        %766 = vmatprep.mubr.bf16.mxu0 0
        %767 = vmatmul.mubr.bf16.gmra.mrb[0].mxu0 %v572
        %v768 = vpop.f32.mrb[0].mxu0
        %v769 = vadd.f32 0.0, %v768
        %v770 = vpop.f32.mrb[0].mxu0
        %v771 = vadd.f32 0.0, %v770
        %v772 = vpop.f32.mrb[0].mxu0
        %v773 = vpop.f32.mrb[0].mxu0
        %774 = vdwg.mxu0
        %775 = vmatprep.subr.bf16.mxu0 0
        %776 = vmatpush1.bf16.msra.mxu0 %v688
        %777 = vmatprep.subr.bf16.mxu0 0
        %778 = vmatpush1.bf16.msra.mxu0 %v691
        %779 = vmatprep.subr.bf16.mxu0 0
        %780 = vmatpush1.bf16.msra.mxu0 %v694
        %781 = vmatprep.subr.bf16.mxu0 0
        %782 = vmatpush1.bf16.msra.mxu0 %v697
        %783 = vmatprep.subr.bf16.mxu0 0
        %784 = vmatpush1.bf16.msra.mxu0 %v700
        %785 = vmatprep.subr.bf16.mxu0 0
        %786 = vmatpush1.bf16.msra.mxu0 %v703
        %787 = vmatprep.subr.bf16.mxu0 0
        %788 = vmatpush1.bf16.msra.mxu0 %v706
        %789 = vmatprep.subr.bf16.mxu0 0
        %790 = vmatpush1.bf16.msra.mxu0 %v709
        %791 = vmatprep.subr.bf16.mxu0 0
        %792 = vmatpush1.bf16.msra.mxu0 0
        %793 = vmatprep.subr.bf16.mxu0 0
        %794 = vmatpush1.bf16.msra.mxu0 0
        %795 = vmatprep.subr.bf16.mxu0 0
        %796 = vmatpush1.bf16.msra.mxu0 0
        %797 = vmatprep.subr.bf16.mxu0 0
        %798 = vmatpush1.bf16.msra.mxu0 0
        %799 = vmatprep.subr.bf16.mxu0 0
        %800 = vmatpush1.bf16.msra.mxu0 0
        %801 = vmatprep.subr.bf16.mxu0 0
        %802 = vmatpush1.bf16.msra.mxu0 0
        %803 = vmatprep.subr.bf16.mxu0 0
        %804 = vmatpush1.bf16.msra.mxu0 0
        %805 = vmatprep.subr.bf16.mxu0 0
        %806 = vmatpush1.bf16.msra.mxu0 0
        %807 = vmatprep.mubr.bf16.mxu0 0
        %808 = vmatmul.mubr.bf16.gmra.mrb[0].mxu0 %v572
        %v809 = vpop.f32.mrb[0].mxu0
        %v810 = vadd.f32 0.0, %v809
        %v811 = vpop.f32.mrb[0].mxu0
        %v812 = vpop.f32.mrb[0].mxu0
        %v813 = vpop.f32.mrb[0].mxu0
        %814 = vdwg.mxu0
        %v815 = vrot.slane %v769, 7
        %v816 = vsel %vm555, %v815, 0.0
        %v817 = vrot.slane %v810, 1
        %v818 = vsel %vm559, %v817, 0.0
        %v819 = vadd.f32 %v816, %v771
        %v820 = vadd.f32 %v819, %v818
        %s821 = scalar_lea.vmem %s4, 1
        %v822 = vld [vmem:[%s821] sm:$0x1]
        %v824 = vlaneseq
        %v825 = vshrl.u32 %v824, 7
        %v826 = vsub.s32 0, %v825
        %v827 = vrot.slane %v822, %v826
        %v829 = vadd.f32 %v820, %v827
        %v830 = vtanh.pop %v829
        %831 = vst [vmem:[%s230] sm:$0xff] %v830
        %s832 = sand.u32 %s138, 1
        %s833 = scalar_lea.sflag [#allocation4], %s832
        %s834 = sand.u32 %s138, 1
        %s835 = smul.addr %s834, 8
        %s836 = scalar_lea.vmem [#allocation5], %s835
        // Predicated region
        $region45: #{tpu_custom_call.1} parent=39 // pred_check
          %p837 = pneg %p148
        $region46: #{tpu_custom_call.1} parent=39 // pred_check_branch
          %839 = sbr.rel (%p837) target = $region48
        $region47: #{tpu_custom_call.1} parent=39 // pred_region
          %s841 = ssub.s32 128, 128
          %842 = vsyncadd %s833, %s841
          %s843 = smul.addr %s20, 128
          %s844 = scalar_lea.hbm %s5, %s843
          %s846 = sshll.u32 %s836, 4
          %s847 = int_to_ptr.vmem [resolvable:$true] %s846
          %849 = dma.vmem_to_hbm [thread:$0]  %s847, 128, %s844, %s833
        $region48: #{tpu_custom_call.1} parent=39 // pred_fallthru
          _
      $region40: #{tpu_custom_call.1} parent=5 // pred_fallthru
        _
      %p850 = scmp.le.s32.totalorder 2, %s15
      // Predicated region
      $region49: #{tpu_custom_call.1} parent=5 // pred_check
        %p851 = pneg %p850
      $region50: #{tpu_custom_call.1} parent=5 // pred_check_branch
        %853 = sbr.rel (%p851) target = $region52
      $region51: #{tpu_custom_call.1} parent=5 // pred_region
        %s854 = ssub.s32 %s15, 2
        // Predicated region
        $region53: #{tpu_custom_call.1} parent=51 // pred_check
          %p855 = pneg %p154
        $region54: #{tpu_custom_call.1} parent=51 // pred_check_branch
          %857 = sbr.rel (%p855) target = $region56
        $region55: #{tpu_custom_call.1} parent=51 // pred_region
          %s858 = sand.u32 %s139, 1
          %s859 = scalar_lea.sflag [#allocation4], %s858
          %s860 = sand.u32 %s139, 1
          %s861 = smul.addr %s860, 8
          %s862 = scalar_lea.vmem [#allocation5], %s861
          %863 = dma.done %s859, 128
        $region56: #{tpu_custom_call.1} parent=51 // pred_fallthru
          _
      $region52: #{tpu_custom_call.1} parent=5 // pred_fallthru
        _
    $region6: #{tpu_custom_call.1} parent=1 // loop_footer
      %s19 = sadd.s32 1, %s15
    $region7: #{tpu_custom_call.1} parent=1 // loop_footer_branch
      %14 = sbr.rel target = $region3
    $region8: #{tpu_custom_call.1} parent=1 // loop_exit
      _
    %864 = vsyncpa [#allocation3], 1
    %s865 = scalar_lea.sflag [#allocation3], 1
    %866 = vsyncpa %s865, 1
    %867 = vsyncpa [#allocation4], 1
    %s868 = scalar_lea.sflag [#allocation4], 1
    %869 = vsyncpa %s868, 1

</llo_original>
